<compile_context>
chip_gen: v7x
topology: tpu7x:2x2x1
jax: 0.10.0
libtpu: 0.0.40
codegen_flags: <defaults>
</compile_context>

<pallas_src>
import jax
import jax.numpy as jnp
from jax.experimental import pallas as pl
from jax.experimental.pallas import tpu as pltpu


LANES = 512          # lane-dense last dim (multiple of 128)
MAX_TM = 1024        # rows per block -> 1024*512*4B = 2 MiB per input block
                     # (2 inputs x 2 pipeline buffers + 2 MiB acc ~= 10 MiB VMEM;
                     #  safe on v5e/v6e/v7x scoped-VMEM defaults)


def _round_up(x: int, m: int) -> int:
    return ((x + m - 1) // m) * m


def _make_loss_kernel(n_true: int):
    """Kernel computing sum((p - t)**2) / n_true over lane-dense (rows, LANES) inputs."""

    def kernel(pred_ref, truth_ref, out_ref, acc_ref):
        i = pl.program_id(0)

        @pl.when(i == 0)
        def _():
            acc_ref[...] = jnp.zeros_like(acc_ref)

        # Cast after the load: HBM traffic stays at the input dtype width,
        # accumulation is always f32.
        d = pred_ref[...].astype(jnp.float32) - truth_ref[...].astype(jnp.float32)
        acc_ref[...] += d * d                               # elementwise VPU add per step

        @pl.when(i == pl.num_programs(0) - 1)
        def _():
            # Single reduction at the end: sublane reduce, then lane reduce.
            partial = jnp.sum(acc_ref[...], axis=0, keepdims=True)    # (1, LANES)
            total = jnp.sum(partial, axis=1, keepdims=True)           # (1, 1)
            out_ref[...] = total / jnp.float32(n_true)

    return kernel


def my_loss(pred: jax.Array, truth: jax.Array) -> jax.Array:
    """JAX/Pallas equivalent of MyLoss.forward for 1-D pred/truth of length N."""
    assert pred.ndim == 1 and pred.shape == truth.shape
    n = pred.shape[0]

    # Lane-dense layout: (rows, LANES), rows a multiple of the row-tile TM.
    rows_needed = _round_up(n, LANES) // LANES
    tm = min(MAX_TM, _round_up(rows_needed, 8))
    rows = _round_up(rows_needed, tm)
    padded = rows * LANES

    if padded != n:
        pad = padded - n
        # Zero-pad BOTH arrays -> padded diffs are exactly 0, sum is unchanged.
        pred = jnp.pad(pred, (0, pad))
        truth = jnp.pad(truth, (0, pad))

    pred2 = pred.reshape(rows, LANES)
    truth2 = truth.reshape(rows, LANES)
    grid = (rows // tm,)

    out = pl.pallas_call(
        _make_loss_kernel(n),
        out_shape=jax.ShapeDtypeStruct((1, 1), jnp.float32),
        grid_spec=pltpu.PrefetchScalarGridSpec(
            num_scalar_prefetch=0,
            grid=grid,
            in_specs=[
                pl.BlockSpec((tm, LANES), lambda i: (i, 0)),
                pl.BlockSpec((tm, LANES), lambda i: (i, 0)),
            ],
            out_specs=pl.BlockSpec((1, 1), lambda i: (0, 0)),
            scratch_shapes=[pltpu.VMEM((tm, LANES), jnp.float32)],
        ),
        compiler_params=pltpu.CompilerParams(
            dimension_semantics=("arbitrary",),     # sequential reduction with accumulator
            vmem_limit_bytes=32 * 1024 * 1024,      # explicit budget, safe on v5e/v6e/v7x
        ),
    )(pred2, truth2)

    return out[0, 0]


def _reference(pred, truth):
    # Pure-JAX reference with the exact PyTorch-module semantics.
    p_r = jnp.tile(pred.astype(jnp.float32), 2).reshape(-1, 2)
    t_r = jnp.tile(truth.astype(jnp.float32), 2).reshape(-1, 2)
    return jnp.mean(jnp.mean((p_r - t_r) ** 2, axis=1), axis=0)


if __name__ == "__main__":
    key = jax.random.PRNGKey(0)

    ok = True
    for n in (512, 1000):   # exact multiple of LANES path and padded path
        key, kp, kt = jax.random.split(key, 3)
        pred = jax.random.normal(kp, (n,), dtype=jnp.float32)
        truth = jax.random.normal(kt, (n,), dtype=jnp.float32)

        loss = my_loss(pred, truth)
        jax.block_until_ready(loss)

        ref = _reference(pred, truth)
        if not jnp.allclose(loss, ref, rtol=1e-5, atol=1e-6):
            ok = False
            print("MISMATCH", n, loss, ref)

    if ok:
        print("KERNEL_OK")
</pallas_src>

<mosaic_0001>
module attributes {stable_mosaic.version = 11 : i64} {
  func.func @kernel(%arg0: i32, %arg1: memref<8x512xf32, #tpu.memory_space<vmem>>, %arg2: memref<8x512xf32, #tpu.memory_space<vmem>>, %arg3: memref<1x1xf32, #tpu.memory_space<vmem>>, %arg4: memref<8x512xf32, #tpu.memory_space<vmem>>) attributes {dimension_semantics = [#tpu.dimension_semantics<arbitrary>], iteration_bounds = array<i64: 1>, scalar_prefetch = 0 : i64, scratch_operands = 1 : i64, tpu.core_type = #tpu.core_type<tc>, window_params = [{transform_indices = @transform_0, window_bounds = array<i64: 8, 512>}, {transform_indices = @transform_1, window_bounds = array<i64: 8, 512>}, {pipeline_mode = #tpu.pipeline_mode<synchronous>, transform_indices = @transform_2, window_bounds = array<i64: 1, 1>}]} {
    %c0_i32 = arith.constant 0 : i32
    %0 = arith.cmpi eq, %arg0, %c0_i32 : i32
    %1 = arith.extui %0 : i1 to i32
    %c0_i32_0 = arith.constant 0 : i32
    %2 = arith.cmpi ne, %1, %c0_i32_0 : i32
    scf.if %2 {
      %cst = arith.constant 0.000000e+00 : f32
      %13 = vector.broadcast %cst : f32 to vector<8x512xf32>
      %c0_10 = arith.constant 0 : index
      %c0_11 = arith.constant 0 : index
      %14 = vector.load %arg4[%c0_10, %c0_11] : memref<8x512xf32, #tpu.memory_space<vmem>>, vector<8x512xf32>
      tpu.vector_store %arg4[%c0_10, %c0_11], %13 {strides = array<i32>} : memref<8x512xf32, #tpu.memory_space<vmem>>, vector<8x512xf32>,
    } else {
    }
    %c0 = arith.constant 0 : index
    %c0_1 = arith.constant 0 : index
    %3 = vector.load %arg1[%c0, %c0_1] : memref<8x512xf32, #tpu.memory_space<vmem>>, vector<8x512xf32>
    %c0_2 = arith.constant 0 : index
    %c0_3 = arith.constant 0 : index
    %4 = vector.load %arg2[%c0_2, %c0_3] : memref<8x512xf32, #tpu.memory_space<vmem>>, vector<8x512xf32>
    %5 = arith.subf %3, %4 : vector<8x512xf32>
    %c0_4 = arith.constant 0 : index
    %c0_5 = arith.constant 0 : index
    %6 = vector.load %arg4[%c0_4, %c0_5] : memref<8x512xf32, #tpu.memory_space<vmem>>, vector<8x512xf32>
    %7 = arith.mulf %5, %5 : vector<8x512xf32>
    %8 = arith.addf %6, %7 : vector<8x512xf32>
    %c0_6 = arith.constant 0 : index
    %c0_7 = arith.constant 0 : index
    %9 = vector.load %arg4[%c0_6, %c0_7] : memref<8x512xf32, #tpu.memory_space<vmem>>, vector<8x512xf32>
    tpu.vector_store %arg4[%c0_6, %c0_7], %8 {strides = array<i32>} : memref<8x512xf32, #tpu.memory_space<vmem>>, vector<8x512xf32>,
    %c0_i32_8 = arith.constant 0 : i32
    %10 = arith.cmpi eq, %arg0, %c0_i32_8 : i32
    %11 = arith.extui %10 : i1 to i32
    %c0_i32_9 = arith.constant 0 : i32
    %12 = arith.cmpi ne, %11, %c0_i32_9 : i32
    scf.if %12 {
      %c0_10 = arith.constant 0 : index
      %c0_11 = arith.constant 0 : index
      %13 = vector.load %arg4[%c0_10, %c0_11] : memref<8x512xf32, #tpu.memory_space<vmem>>, vector<8x512xf32>
      %cst = arith.constant dense<0.000000e+00> : vector<512xf32>
      %14 = vector.multi_reduction <add>, %13, %cst [0] : vector<8x512xf32> to vector<512xf32>
      %15 = vector.shape_cast %14 : vector<512xf32> to vector<1x512xf32>
      %cst_12 = arith.constant dense<0.000000e+00> : vector<1xf32>
      %16 = vector.multi_reduction <add>, %15, %cst_12 [1] : vector<1x512xf32> to vector<1xf32>
      %17 = vector.shape_cast %16 : vector<1xf32> to vector<1x1xf32>
      %cst_13 = arith.constant 5.120000e+02 : f32
      %18 = vector.broadcast %cst_13 : f32 to vector<1x1xf32>
      %19 = arith.divf %17, %18 : vector<1x1xf32>
      %c0_14 = arith.constant 0 : index
      %c0_15 = arith.constant 0 : index
      %20 = vector.load %arg3[%c0_14, %c0_15] : memref<1x1xf32, #tpu.memory_space<vmem>>, vector<1x1xf32>
      tpu.vector_store %arg3[%c0_14, %c0_15], %19 {strides = array<i32>} : memref<1x1xf32, #tpu.memory_space<vmem>>, vector<1x1xf32>,
    } else {
    }
    return
  }
  func.func @transform_0(%arg0: i32) -> (i32, i32) {
    %c0_i32 = arith.constant 0 : i32
    %c0_i32_0 = arith.constant 0 : i32
    return %arg0, %c0_i32 : i32, i32
  }
  func.func @transform_1(%arg0: i32) -> (i32, i32) {
    %c0_i32 = arith.constant 0 : i32
    %c0_i32_0 = arith.constant 0 : i32
    return %arg0, %c0_i32 : i32, i32
  }
  func.func @transform_2(%arg0: i32) -> (i32, i32) {
    %c0_i32 = arith.constant 0 : i32
    %c0_i32_0 = arith.constant 0 : i32
    %c0_i32_1 = arith.constant 0 : i32
    return %c0_i32, %c0_i32_0 : i32, i32
  }
}

</mosaic_0001>

<llo_original>
// kernel: tpu_custom_call.1
$region0: #{tpu_custom_call.1}
  #allocation0 [shape = 'u32[]', space=smem, size = 0x4, offset = 0x4, fixed_abs, tag = 'smem constant byte address 0x4 - core index']
  #allocation1 [shape = 'u32[144,128]{1,0:T(1,128)}', space=vmem, size = 0x12000, scoped, tag = 'internal scratch']
  #allocation2 [shape = 'f32[8,512]{1,0:T(8,128)}', space=vmem, size = 0x4000, scoped, tag = 'scratch operand']
  %s0 = inlined_call_operand.hbm [shape: f32[8,512], index: 0, kind: input, shape index: {}]
  %s1 = inlined_call_operand.hbm [shape: f32[8,512], index: 1, kind: input, shape index: {}]
  %s2 = inlined_call_operand.hbm [shape: f32[1,1], index: 2, kind: output, shape index: {}]
  %s3 = sld [smem:[#allocation0]]
  $region34: #{tpu_custom_call.1} parent=0
    _
  %s5 = ssub.s32 1, %s3
  %s6 = scalar_select 0, %s5, %s3
  $region1: #{tpu_custom_call.1} parent=0
    #allocation3 [shape = 'u8[16384]{0}', space=vmem, size = 0x4000, scoped, tag = 'input window, operand 0, single buffered']
    #allocation4 [shape = 's32[1]{0}', space=sflag, size = 0x4, scoped, tag = 'scoped memory for tpu_custom_call.1']
    #allocation5 [shape = 's32[1]{0}', space=sflag, size = 0x4, scoped, tag = 'scoped memory for tpu_custom_call.1']
    #allocation6 [shape = 'u8[16384]{0}', space=vmem, size = 0x4000, scoped, tag = 'input window, operand 1, single buffered']
    #allocation7 [shape = 's32[1]{0}', space=sflag, size = 0x4, scoped, tag = 'scoped memory for tpu_custom_call.1']
    #allocation8 [shape = 'u8[512]{0}', space=vmem, size = 0x400, scoped, tag = 'output window, operand 0, single buffered']
    %7 = vsyncpa [#allocation4], 0
    %8 = vsyncpa [#allocation7], 0
    %9 = vsyncpa [#allocation5], 0
    // Predicated region
    $region2: #{tpu_custom_call.1} parent=1 // pred_check
      _
    $region3: #{tpu_custom_call.1} parent=1 // pred_check_branch
      %11 = sbr.rel (0) target = $region5
    $region4: #{tpu_custom_call.1} parent=1 // pred_region
      %s13 = ssub.s32 512, 512
      %14 = vsyncadd [#allocation4], %s13
      %s16 = sshll.u32 [#allocation3], 4
      %s17 = int_to_ptr.vmem [resolvable:$true] %s16
      %19 = dma.hbm_to_vmem [thread:$0]  %s0, 512, %s17, [#allocation4]
    $region5: #{tpu_custom_call.1} parent=1 // pred_fallthru
      _
    // Predicated region
    $region6: #{tpu_custom_call.1} parent=1 // pred_check
      _
    $region7: #{tpu_custom_call.1} parent=1 // pred_check_branch
      %21 = sbr.rel (0) target = $region9
    $region8: #{tpu_custom_call.1} parent=1 // pred_region
      %s23 = ssub.s32 512, 512
      %24 = vsyncadd [#allocation7], %s23
      %s26 = sshll.u32 [#allocation6], 4
      %s27 = int_to_ptr.vmem [resolvable:$true] %s26
      %29 = dma.hbm_to_vmem [thread:$0]  %s1, 512, %s27, [#allocation7]
    $region9: #{tpu_custom_call.1} parent=1 // pred_fallthru
      _
    // Predicated region
    $region10: #{tpu_custom_call.1} parent=1 // pred_check
      _
    $region11: #{tpu_custom_call.1} parent=1 // pred_check_branch
      %31 = sbr.rel (0) target = $region13
    $region12: #{tpu_custom_call.1} parent=1 // pred_region
      %32 = dma.done [#allocation4], 512
    $region13: #{tpu_custom_call.1} parent=1 // pred_fallthru
      _
    // Predicated region
    $region14: #{tpu_custom_call.1} parent=1 // pred_check
      _
    $region15: #{tpu_custom_call.1} parent=1 // pred_check_branch
      %34 = sbr.rel (0) target = $region17
    $region16: #{tpu_custom_call.1} parent=1 // pred_region
      %35 = dma.done [#allocation7], 512
    $region17: #{tpu_custom_call.1} parent=1 // pred_fallthru
      _
    %p36 = scmp.eq.s32.totalorder 0, 0
    // Predicated region
    $region18: #{tpu_custom_call.1} parent=1 // pred_check
      %p37 = pneg %p36
    $region19: #{tpu_custom_call.1} parent=1 // pred_check_branch
      %39 = sbr.rel (%p37) target = $region21
    $region20: #{tpu_custom_call.1} parent=1 // pred_region
      %40 = vst [vmem:[#allocation2] sm:$0xff] 0.0
      %41 = vst [vmem:[#allocation2 + $0x8] sm:$0xff] 0.0
      %42 = vst [vmem:[#allocation2 + $0x10] sm:$0xff] 0.0
      %43 = vst [vmem:[#allocation2 + $0x18] sm:$0xff] 0.0
    $region21: #{tpu_custom_call.1} parent=1 // pred_fallthru
      _
    %v44 = vld [vmem:[#allocation3] sm:$0xff]
    %v45 = vld [vmem:[#allocation3 + $0x8] sm:$0xff]
    %v46 = vld [vmem:[#allocation3 + $0x10] sm:$0xff]
    %v47 = vld [vmem:[#allocation3 + $0x18] sm:$0xff]
    %v48 = vld [vmem:[#allocation6] sm:$0xff]
    %v49 = vld [vmem:[#allocation6 + $0x8] sm:$0xff]
    %v50 = vld [vmem:[#allocation6 + $0x10] sm:$0xff]
    %v51 = vld [vmem:[#allocation6 + $0x18] sm:$0xff]
    %v52 = vsub.f32 %v44, %v48
    %v53 = vsub.f32 %v45, %v49
    %v54 = vsub.f32 %v46, %v50
    %v55 = vsub.f32 %v47, %v51
    %v56 = vld [vmem:[#allocation2] sm:$0xff]
    %v57 = vld [vmem:[#allocation2 + $0x8] sm:$0xff]
    %v58 = vld [vmem:[#allocation2 + $0x10] sm:$0xff]
    %v59 = vld [vmem:[#allocation2 + $0x18] sm:$0xff]
    %v60 = vmul.f32 %v52, %v52
    %v61 = vmul.f32 %v53, %v53
    %v62 = vmul.f32 %v54, %v54
    %v63 = vmul.f32 %v55, %v55
    %v64 = vadd.f32 %v56, %v60
    %v65 = vadd.f32 %v57, %v61
    %v66 = vadd.f32 %v58, %v62
    %v67 = vadd.f32 %v59, %v63
    %68 = vst [vmem:[#allocation2] sm:$0xff] %v64
    %69 = vst [vmem:[#allocation2 + $0x8] sm:$0xff] %v65
    %70 = vst [vmem:[#allocation2 + $0x10] sm:$0xff] %v66
    %71 = vst [vmem:[#allocation2 + $0x18] sm:$0xff] %v67
    // Predicated region
    $region22: #{tpu_custom_call.1} parent=1 // pred_check
      %p72 = pneg %p36
    $region23: #{tpu_custom_call.1} parent=1 // pred_check_branch
      %74 = sbr.rel (%p72) target = $region25
    $region24: #{tpu_custom_call.1} parent=1 // pred_region
      %v75 = vld [vmem:[#allocation2] sm:$0xff]
      %v76 = vld [vmem:[#allocation2 + $0x8] sm:$0xff]
      %v77 = vld [vmem:[#allocation2 + $0x10] sm:$0xff]
      %v78 = vld [vmem:[#allocation2 + $0x18] sm:$0xff]
      %v79 = vrot.slane %v75, 4
      %v80 = vadd.f32 %v75, %v79
      %v81 = vrot.slane %v80, 2
      %v82 = vadd.f32 %v80, %v81
      %v83 = vrot.slane %v82, 1
      %v84 = vadd.f32 %v82, %v83
      %v85 = vrot.slane %v76, 4
      %v86 = vadd.f32 %v76, %v85
      %v87 = vrot.slane %v86, 2
      %v88 = vadd.f32 %v86, %v87
      %v89 = vrot.slane %v88, 1
      %v90 = vadd.f32 %v88, %v89
      %v91 = vrot.slane %v77, 4
      %v92 = vadd.f32 %v77, %v91
      %v93 = vrot.slane %v92, 2
      %v94 = vadd.f32 %v92, %v93
      %v95 = vrot.slane %v94, 1
      %v96 = vadd.f32 %v94, %v95
      %v97 = vrot.slane %v78, 4
      %v98 = vadd.f32 %v78, %v97
      %v99 = vrot.slane %v98, 2
      %v100 = vadd.f32 %v98, %v99
      %v101 = vrot.slane %v100, 1
      %v102 = vadd.f32 %v100, %v101
      %v103 = vadd.f32 %v84, %v90
      %v104 = vadd.f32 %v103, %v96
      %v105 = vadd.f32 %v104, %v102
      %106 = vadd.xlane.f32.xlu0 %v105
      %v107 = vpop.xlane.xlu0 %106
      %v108 = vrcp.pop 512.0
      %v109 = vmul.f32 %v107, %v108
      %vm110 = vcmask 0
      %111 = vst.msk [vmem:[#allocation8] sm:$0x1] %vm110, %v109
    $region25: #{tpu_custom_call.1} parent=1 // pred_fallthru
      _
    // Predicated region
    $region26: #{tpu_custom_call.1} parent=1 // pred_check
      _
    $region27: #{tpu_custom_call.1} parent=1 // pred_check_branch
      %113 = sbr.rel (0) target = $region29
    $region28: #{tpu_custom_call.1} parent=1 // pred_region
      %s115 = ssub.s32 16, 16
      %116 = vsyncadd [#allocation5], %s115
      %s118 = sshll.u32 [#allocation8], 4
      %s119 = int_to_ptr.vmem [resolvable:$true] %s118
      %121 = dma.vmem_to_hbm [thread:$0]  %s119, 16, %s2, [#allocation5]
    $region29: #{tpu_custom_call.1} parent=1 // pred_fallthru
      _
    // Predicated region
    $region30: #{tpu_custom_call.1} parent=1 // pred_check
      _
    $region31: #{tpu_custom_call.1} parent=1 // pred_check_branch
      %123 = sbr.rel (0) target = $region33
    $region32: #{tpu_custom_call.1} parent=1 // pred_region
      %124 = dma.done [#allocation5], 16
    $region33: #{tpu_custom_call.1} parent=1 // pred_fallthru
      _
    %125 = vsyncpa [#allocation4], 1
    %126 = vsyncpa [#allocation7], 1
    %127 = vsyncpa [#allocation5], 1

</llo_original>
